<compile_context>
chip_gen: v7x
topology: tpu7x:2x2x1
jax: 0.10.0
libtpu: 0.0.40
codegen_flags: <defaults>
</compile_context>

<pallas_src>
import jax
import jax.numpy as jnp
from jax.experimental import pallas as pl
from jax.experimental.pallas import tpu as pltpu


def _align_conv_kernel(x_ref, wt_ref, b_ref, o_ref):
    # x_ref : (tile_b, c_in,  tile_n)   spatial (T*N) on the lane axis
    # wt_ref: (c_out, c_in)             resident in VMEM across the grid
    # b_ref : (c_out, 1)
    # o_ref : (tile_b, c_out, tile_n)
    bias = b_ref[...]
    for i in range(x_ref.shape[0]):  # static unroll; tile_b is small (<= 8)
        acc = jnp.dot(wt_ref[...], x_ref[i],
                      preferred_element_type=jnp.float32)
        o_ref[i] = (acc + bias).astype(o_ref.dtype)


def _pick_tiles(batch, spatial, c_in, c_out, *, lane_target=8192,
                max_tile_b=8, vmem_budget=8 * 1024 * 1024):
    """Pick (tile_b, tile_n).

    tile_n: the full spatial extent when it is small (single lane block,
    no partial stores), else a large multiple of 128 bounded by the VMEM
    budget.  tile_b: as many batch rows per step as fit the same budget,
    capped so the unrolled kernel body stays tiny.
    """
    bytes_per_bl = (c_in + c_out) * 4 * 2          # f32 in+out, double-buffered
    if spatial <= lane_target:
        tile_n = spatial
    else:
        fit = (vmem_budget // bytes_per_bl) // 128 * 128
        tile_n = max(128, min(lane_target, fit))
    tile_b = int(max(1, min(batch, max_tile_b,
                            vmem_budget // (bytes_per_bl * tile_n))))
    return tile_b, tile_n


def _conv1x1_nchw(x, w_t, bias, *, lane_target=8192, max_tile_b=8):
    """1x1 conv on NCHW input without any layout transpose.

    x    : (B, c_in, T, N) float32
    w_t  : (c_out, c_in)          (= PyTorch weight[:, :, 0, 0])
    bias : (c_out,)
    ->     (B, c_out, T, N)
    """
    B, c_in, T, N = x.shape
    c_out = w_t.shape[0]
    S = T * N
    x3 = x.reshape(B, c_in, S)              # contiguous reshape, no data movement

    tile_b, tile_n = _pick_tiles(B, S, c_in, c_out,
                                 lane_target=lane_target, max_tile_b=max_tile_b)
    grid_b = pl.cdiv(B, tile_b)
    grid_n = pl.cdiv(S, tile_n)

    bias2d = bias.reshape(c_out, 1)

    out = pl.pallas_call(
        _align_conv_kernel,
        out_shape=jax.ShapeDtypeStruct((B, c_out, S), x.dtype),
        grid_spec=pltpu.PrefetchScalarGridSpec(
            num_scalar_prefetch=0,
            grid=(grid_b, grid_n),
            in_specs=[
                pl.BlockSpec((tile_b, c_in, tile_n), lambda b, j: (b, 0, j)),
                pl.BlockSpec((c_out, c_in), lambda b, j: (0, 0)),
                pl.BlockSpec((c_out, 1), lambda b, j: (0, 0)),
            ],
            out_specs=pl.BlockSpec((tile_b, c_out, tile_n),
                                   lambda b, j: (b, 0, j)),
        ),
        compiler_params=pltpu.CompilerParams(
            dimension_semantics=("parallel", "parallel")),
    )(x3, w_t, bias2d)

    return out.reshape(B, c_out, T, N)


class Align:
    """JAX/Pallas port of the PyTorch Align module (forward pass)."""

    def __init__(self, c_in, c_out, key):
        self.c_in = c_in
        self.c_out = c_out
        kw, kb = jax.random.split(key)
        fan_in = c_in  # kernel_size = (1, 1)
        bound = 1.0 / jnp.sqrt(fan_in)
        # Stored directly in matmul form: W_T[c_out, c_in] == weight[:, :, 0, 0]
        self.weight_t = jax.random.uniform(
            kw, (c_out, c_in), jnp.float32, -bound, bound)
        self.bias = jax.random.uniform(
            kb, (c_out,), jnp.float32, -bound, bound)

    def __call__(self, x):
        # x: (B, C_in, T, N) float32 (NCHW, matching the PyTorch module)
        B, c_in, T, N = x.shape
        assert c_in == self.c_in
        if self.c_in > self.c_out:
            return _conv1x1_nchw(x, self.weight_t, self.bias)
        elif self.c_in < self.c_out:
            # Zero-pad channels: pure data movement, single-pass lax.pad.
            return jax.lax.pad(
                x, jnp.array(0, x.dtype),
                ((0, 0, 0), (0, self.c_out - self.c_in, 0),
                 (0, 0, 0), (0, 0, 0)))
        else:
            return x


def _reference_conv(x, w_t, bias):
    return (jnp.einsum("bchw,oc->bohw", x, w_t)
            + bias.reshape(1, -1, 1, 1))


def _reference_align(x, align):
    """Pure-JAX reference of the PyTorch forward for correctness check."""
    if align.c_in > align.c_out:
        return _reference_conv(x, align.weight_t, align.bias)
    elif align.c_in < align.c_out:
        B, _, T, N = x.shape
        pad = jnp.zeros((B, align.c_out - align.c_in, T, N), dtype=x.dtype)
        return jnp.concatenate([x, pad], axis=1)
    else:
        return x


if __name__ == "__main__":
    key = jax.random.PRNGKey(0)
    k_x, k_p1, k_p2, k_x2, k_x3 = jax.random.split(key, 5)

    B, T, N = 2, 8, 16

    # --- Case 1: c_in > c_out -> Pallas 1x1-conv kernel (the hot path) ---
    c_in, c_out = 8, 4
    x = jax.random.normal(k_x, (B, c_in, T, N), dtype=jnp.float32)
    align_down = Align(c_in, c_out, k_p1)
    y = jax.block_until_ready(align_down(x))
    y_ref = _reference_align(x, align_down)
    assert y.shape == (B, c_out, T, N)
    assert jnp.allclose(y, y_ref, atol=1e-5, rtol=1e-5)

    # --- Case 1b: multi-step lane grid (grid_n > 1), evenly divided ---
    T2, N2 = 8, 48  # S = 384 -> 3 lane tiles of 128
    xb = jax.random.normal(k_x2, (B, c_in, T2, N2), dtype=jnp.float32)
    yb = jax.block_until_ready(
        _conv1x1_nchw(xb, align_down.weight_t, align_down.bias,
                      lane_target=128, max_tile_b=1))
    yb_ref = _reference_conv(xb, align_down.weight_t, align_down.bias)
    assert jnp.allclose(yb, yb_ref, atol=1e-5, rtol=1e-5)

    # --- Case 1c: ragged blocks on both grid axes (masked writeback) ---
    B3, T3, N3 = 3, 8, 40   # S = 320 -> lane tiles 128/128/64 ; batch tiles 2/1
    xr = jax.random.normal(k_x3, (B3, c_in, T3, N3), dtype=jnp.float32)
    yr = jax.block_until_ready(
        _conv1x1_nchw(xr, align_down.weight_t, align_down.bias,
                      lane_target=128, max_tile_b=2))
    yr_ref = _reference_conv(xr, align_down.weight_t, align_down.bias)
    assert jnp.allclose(yr, yr_ref, atol=1e-5, rtol=1e-5)

    # --- Case 2: c_in < c_out -> zero-pad channels ---
    align_up = Align(4, 8, k_p2)
    x2 = x[:, :4]
    y2 = jax.block_until_ready(align_up(x2))
    assert y2.shape == (B, 8, T, N)
    assert jnp.allclose(y2, _reference_align(x2, align_up))

    # --- Case 3: c_in == c_out -> identity ---
    align_same = Align(c_in, c_in, k_p2)
    y3 = jax.block_until_ready(align_same(x))
    assert jnp.array_equal(y3, x)

    print("KERNEL_OK")
</pallas_src>

<mosaic_0001>
module attributes {stable_mosaic.version = 11 : i64} {
  func.func @_align_conv_kernel(%arg0: i32, %arg1: i32, %arg2: memref<2x8x128xf32, #tpu.memory_space<vmem>>, %arg3: memref<4x8xf32, #tpu.memory_space<vmem>>, %arg4: memref<4x1xf32, #tpu.memory_space<vmem>>, %arg5: memref<2x4x128xf32, #tpu.memory_space<vmem>>) attributes {dimension_semantics = [#tpu.dimension_semantics<parallel>, #tpu.dimension_semantics<parallel>], iteration_bounds = array<i64: 1, 1>, scalar_prefetch = 0 : i64, scratch_operands = 0 : i64, tpu.core_type = #tpu.core_type<tc>, window_params = [{transform_indices = @transform_0, window_bounds = array<i64: 2, 8, 128>}, {pipeline_mode = #tpu.pipeline_mode<synchronous>, transform_indices = @transform_1, window_bounds = array<i64: 4, 8>}, {pipeline_mode = #tpu.pipeline_mode<synchronous>, transform_indices = @transform_2, window_bounds = array<i64: 4, 1>}, {transform_indices = @transform_3, window_bounds = array<i64: 2, 4, 128>}]} {
    %c0 = arith.constant 0 : index
    %c0_0 = arith.constant 0 : index
    %0 = vector.load %arg4[%c0, %c0_0] : memref<4x1xf32, #tpu.memory_space<vmem>>, vector<4x1xf32>
    %c0_1 = arith.constant 0 : index
    %c0_2 = arith.constant 0 : index
    %1 = vector.load %arg3[%c0_1, %c0_2] : memref<4x8xf32, #tpu.memory_space<vmem>>, vector<4x8xf32>
    %c0_3 = arith.constant 0 : index
    %c0_4 = arith.constant 0 : index
    %c0_5 = arith.constant 0 : index
    %2 = vector.load %arg2[%c0_3, %c0_4, %c0_5] : memref<2x8x128xf32, #tpu.memory_space<vmem>>, vector<1x8x128xf32>
    %3 = vector.shape_cast %2 : vector<1x8x128xf32> to vector<8x128xf32>
    %cst = arith.constant dense<0.000000e+00> : vector<4x128xf32>
    %4 = tpu.matmul %1, %3, %cst {dimension_numbers = #tpu.dot_dimension_numbers<[1], [0], [0], [1], [0, 0, 1, 1], [], []>} : vector<4x8xf32>, vector<8x128xf32>, vector<4x128xf32> -> vector<4x128xf32>
    %5 = vector.broadcast %0 : vector<4x1xf32> to vector<4x128xf32>
    %6 = arith.addf %4, %5 : vector<4x128xf32>
    %c0_6 = arith.constant 0 : index
    %c0_7 = arith.constant 0 : index
    %c0_8 = arith.constant 0 : index
    %7 = vector.load %arg5[%c0_6, %c0_7, %c0_8] : memref<2x4x128xf32, #tpu.memory_space<vmem>>, vector<1x4x128xf32>
    %8 = vector.shape_cast %7 : vector<1x4x128xf32> to vector<4x128xf32>
    %9 = vector.shape_cast %6 : vector<4x128xf32> to vector<1x4x128xf32>
    tpu.vector_store %arg5[%c0_6, %c0_7, %c0_8], %9 {strides = array<i32>} : memref<2x4x128xf32, #tpu.memory_space<vmem>>, vector<1x4x128xf32>,
    %c0_9 = arith.constant 0 : index
    %c0_10 = arith.constant 0 : index
    %10 = vector.load %arg3[%c0_9, %c0_10] : memref<4x8xf32, #tpu.memory_space<vmem>>, vector<4x8xf32>
    %c1 = arith.constant 1 : index
    %c0_11 = arith.constant 0 : index
    %c0_12 = arith.constant 0 : index
    %11 = vector.load %arg2[%c1, %c0_11, %c0_12] : memref<2x8x128xf32, #tpu.memory_space<vmem>>, vector<1x8x128xf32>
    %12 = vector.shape_cast %11 : vector<1x8x128xf32> to vector<8x128xf32>
    %cst_13 = arith.constant dense<0.000000e+00> : vector<4x128xf32>
    %13 = tpu.matmul %10, %12, %cst_13 {dimension_numbers = #tpu.dot_dimension_numbers<[1], [0], [0], [1], [0, 0, 1, 1], [], []>} : vector<4x8xf32>, vector<8x128xf32>, vector<4x128xf32> -> vector<4x128xf32>
    %14 = vector.broadcast %0 : vector<4x1xf32> to vector<4x128xf32>
    %15 = arith.addf %13, %14 : vector<4x128xf32>
    %c1_14 = arith.constant 1 : index
    %c0_15 = arith.constant 0 : index
    %c0_16 = arith.constant 0 : index
    %16 = vector.load %arg5[%c1_14, %c0_15, %c0_16] : memref<2x4x128xf32, #tpu.memory_space<vmem>>, vector<1x4x128xf32>
    %17 = vector.shape_cast %16 : vector<1x4x128xf32> to vector<4x128xf32>
    %18 = vector.shape_cast %15 : vector<4x128xf32> to vector<1x4x128xf32>
    tpu.vector_store %arg5[%c1_14, %c0_15, %c0_16], %18 {strides = array<i32>} : memref<2x4x128xf32, #tpu.memory_space<vmem>>, vector<1x4x128xf32>,
    return
  }
  func.func @transform_0(%arg0: i32, %arg1: i32) -> (i32, i32, i32) {
    %c0_i32 = arith.constant 0 : i32
    %c0_i32_0 = arith.constant 0 : i32
    return %arg0, %c0_i32, %arg1 : i32, i32, i32
  }
  func.func @transform_1(%arg0: i32, %arg1: i32) -> (i32, i32) {
    %c0_i32 = arith.constant 0 : i32
    %c0_i32_0 = arith.constant 0 : i32
    %c0_i32_1 = arith.constant 0 : i32
    return %c0_i32, %c0_i32_0 : i32, i32
  }
  func.func @transform_2(%arg0: i32, %arg1: i32) -> (i32, i32) {
    %c0_i32 = arith.constant 0 : i32
    %c0_i32_0 = arith.constant 0 : i32
    %c0_i32_1 = arith.constant 0 : i32
    return %c0_i32, %c0_i32_0 : i32, i32
  }
  func.func @transform_3(%arg0: i32, %arg1: i32) -> (i32, i32, i32) {
    %c0_i32 = arith.constant 0 : i32
    %c0_i32_0 = arith.constant 0 : i32
    return %arg0, %c0_i32, %arg1 : i32, i32, i32
  }
}

</mosaic_0001>

<llo_original>
// kernel: tpu_custom_call.1
$region0: #{tpu_custom_call.1}
  #allocation0 [shape = 'u32[]', space=smem, size = 0x4, offset = 0x4, fixed_abs, tag = 'smem constant byte address 0x4 - core index']
  #allocation1 [shape = 'u32[144,128]{1,0:T(1,128)}', space=vmem, size = 0x12000, scoped, tag = 'internal scratch']
  %s0 = inlined_call_operand.hbm [shape: f32[2,8,128], index: 0, kind: input, shape index: {}]
  %s1 = inlined_call_operand.vmem [shape: f32[4,8], index: 1, kind: input, shape index: {}]
  %s2 = inlined_call_operand.vmem [shape: f32[4,1], index: 2, kind: input, shape index: {}]
  %s3 = inlined_call_operand.hbm [shape: f32[2,4,128], index: 3, kind: output, shape index: {}]
  %s4 = sld [smem:[#allocation0]]
  $region26: #{tpu_custom_call.1} parent=0
    _
  %s6 = ssub.s32 1, %s4
  %s7 = scalar_select 0, %s6, %s4
  $region1: #{tpu_custom_call.1} parent=0
    #allocation2 [shape = 'u8[8192]{0}', space=vmem, size = 0x2000, scoped, tag = 'input window, operand 0, single buffered']
    #allocation3 [shape = 's32[1]{0}', space=sflag, size = 0x4, scoped, tag = 'scoped memory for tpu_custom_call.1']
    #allocation4 [shape = 's32[1]{0}', space=sflag, size = 0x4, scoped, tag = 'scoped memory for tpu_custom_call.1']
    #allocation5 [shape = 'u8[4096]{0}', space=vmem, size = 0x1000, scoped, tag = 'output window, operand 0, single buffered']
    %8 = vsyncpa [#allocation3], 0
    %9 = vsyncpa [#allocation4], 0
    // Predicated region
    $region2: #{tpu_custom_call.1} parent=1 // pred_check
      _
    $region3: #{tpu_custom_call.1} parent=1 // pred_check_branch
      %11 = sbr.rel (0) target = $region5
    $region4: #{tpu_custom_call.1} parent=1 // pred_region
      %s13 = ssub.s32 256, 256
      %14 = vsyncadd [#allocation3], %s13
      %s15 = sshll.u32 [#allocation2], 4
      %s16 = int_to_ptr.vmem [resolvable:$true] %s15
      %21 = dma.hbm_to_vmem [thread:$0]  %s0, 256, %s16, [#allocation3], 128, 128, 8
    $region5: #{tpu_custom_call.1} parent=1 // pred_fallthru
      _
    // Predicated region
    $region6: #{tpu_custom_call.1} parent=1 // pred_check
      _
    $region7: #{tpu_custom_call.1} parent=1 // pred_check_branch
      %23 = sbr.rel (0) target = $region9
    $region8: #{tpu_custom_call.1} parent=1 // pred_region
      _
    $region9: #{tpu_custom_call.1} parent=1 // pred_fallthru
      _
    // Predicated region
    $region10: #{tpu_custom_call.1} parent=1 // pred_check
      _
    $region11: #{tpu_custom_call.1} parent=1 // pred_check_branch
      %25 = sbr.rel (0) target = $region13
    $region12: #{tpu_custom_call.1} parent=1 // pred_region
      _
    $region13: #{tpu_custom_call.1} parent=1 // pred_fallthru
      _
    // Predicated region
    $region14: #{tpu_custom_call.1} parent=1 // pred_check
      _
    $region15: #{tpu_custom_call.1} parent=1 // pred_check_branch
      %27 = sbr.rel (0) target = $region17
    $region16: #{tpu_custom_call.1} parent=1 // pred_region
      %28 = dma.done [#allocation3], 256
    $region17: #{tpu_custom_call.1} parent=1 // pred_fallthru
      _
    %v29 = vld [vmem:[%s2] sm:$0xf]
    %v30 = vld [vmem:[%s1] sm:$0xf]
    %v31 = vld [vmem:[#allocation2] sm:$0xff]
    %33 = vset.pattern.permute.xlu0 0
    %34 = vperm.xlu0 %33, %v29
    %v35 = vpop.permute.xlu0 %34
    %vm37 = vcmask 64512
    %v39 = vsel %vm37, %v30, 0
    %41 = vmatprep.subr.mxu0 0.0
    %42 = vmatpush1.msra.mxu0 %v31
    %43 = vmatprep.subr.mxu0 0.0
    %44 = vmatpush1.msra.mxu0 0.0
    %45 = vmatprep.subr.mxu0 0.0
    %46 = vmatpush1.msra.mxu0 0.0
    %47 = vmatprep.subr.mxu0 0.0
    %48 = vmatpush1.msra.mxu0 0.0
    %49 = vmatprep.subr.mxu0 0.0
    %50 = vmatpush1.msra.mxu0 0.0
    %51 = vmatprep.subr.mxu0 0.0
    %52 = vmatpush1.msra.mxu0 0.0
    %53 = vmatprep.subr.mxu0 0.0
    %54 = vmatpush1.msra.mxu0 0.0
    %55 = vmatprep.subr.mxu0 0.0
    %56 = vmatpush1.msra.mxu0 0.0
    %57 = vmatprep.subr.mxu0 0.0
    %58 = vmatpush1.msra.mxu0 0.0
    %59 = vmatprep.subr.mxu0 0.0
    %60 = vmatpush1.msra.mxu0 0.0
    %61 = vmatprep.subr.mxu0 0.0
    %62 = vmatpush1.msra.mxu0 0.0
    %63 = vmatprep.subr.mxu0 0.0
    %64 = vmatpush1.msra.mxu0 0.0
    %65 = vmatprep.subr.mxu0 0.0
    %66 = vmatpush1.msra.mxu0 0.0
    %67 = vmatprep.subr.mxu0 0.0
    %68 = vmatpush1.msra.mxu0 0.0
    %69 = vmatprep.subr.mxu0 0.0
    %70 = vmatpush1.msra.mxu0 0.0
    %71 = vmatprep.subr.mxu0 0.0
    %72 = vmatpush1.msra.mxu0 0.0
    %73 = vmatprep.subr.mxu0 0.0
    %74 = vmatpush1.msra.mxu0 0.0
    %75 = vmatprep.subr.mxu0 0.0
    %76 = vmatpush1.msra.mxu0 0.0
    %77 = vmatprep.subr.mxu0 0.0
    %78 = vmatpush1.msra.mxu0 0.0
    %79 = vmatprep.subr.mxu0 0.0
    %80 = vmatpush1.msra.mxu0 0.0
    %81 = vmatprep.subr.mxu0 0.0
    %82 = vmatpush1.msra.mxu0 0.0
    %83 = vmatprep.subr.mxu0 0.0
    %84 = vmatpush1.msra.mxu0 0.0
    %85 = vmatprep.subr.mxu0 0.0
    %86 = vmatpush1.msra.mxu0 0.0
    %87 = vmatprep.subr.mxu0 0.0
    %88 = vmatpush1.msra.mxu0 0.0
    %89 = vmatprep.subr.mxu0 0.0
    %90 = vmatpush1.msra.mxu0 0.0
    %91 = vmatprep.subr.mxu0 0.0
    %92 = vmatpush1.msra.mxu0 0.0
    %93 = vmatprep.subr.mxu0 0.0
    %94 = vmatpush1.msra.mxu0 0.0
    %95 = vmatprep.subr.mxu0 0.0
    %96 = vmatpush1.msra.mxu0 0.0
    %97 = vmatprep.subr.mxu0 0.0
    %98 = vmatpush1.msra.mxu0 0.0
    %99 = vmatprep.subr.mxu0 0.0
    %100 = vmatpush1.msra.mxu0 0.0
    %101 = vmatprep.subr.mxu0 0.0
    %102 = vmatpush1.msra.mxu0 0.0
    %103 = vmatprep.subr.mxu0 0.0
    %104 = vmatpush1.msra.mxu0 0.0
    %105 = vmatprep.mubr.f32.mxu0 0.0
    %106 = vmatmul.mubr.f32.gmra.mrb[0].mxu0 %v39
    %v107 = vpop.f32.mrb[0].mxu0
    %v108 = vadd.f32 %v35, %v107
    %v109 = vpop.f32.mrb[0].mxu0
    %110 = vdwg.mxu0
    %111 = vst [vmem:[#allocation5] sm:$0xf] %v108
    %v112 = vld [vmem:[%s1] sm:$0xf]
    %s113 = scalar_lea.vmem [#allocation2], 8
    %v114 = vld [vmem:[%s113] sm:$0xff]
    %v116 = vsel %vm37, %v112, 0
    %118 = vmatprep.subr.mxu0 0.0
    %119 = vmatpush1.msra.mxu0 %v114
    %120 = vmatprep.subr.mxu0 0.0
    %121 = vmatpush1.msra.mxu0 0.0
    %122 = vmatprep.subr.mxu0 0.0
    %123 = vmatpush1.msra.mxu0 0.0
    %124 = vmatprep.subr.mxu0 0.0
    %125 = vmatpush1.msra.mxu0 0.0
    %126 = vmatprep.subr.mxu0 0.0
    %127 = vmatpush1.msra.mxu0 0.0
    %128 = vmatprep.subr.mxu0 0.0
    %129 = vmatpush1.msra.mxu0 0.0
    %130 = vmatprep.subr.mxu0 0.0
    %131 = vmatpush1.msra.mxu0 0.0
    %132 = vmatprep.subr.mxu0 0.0
    %133 = vmatpush1.msra.mxu0 0.0
    %134 = vmatprep.subr.mxu0 0.0
    %135 = vmatpush1.msra.mxu0 0.0
    %136 = vmatprep.subr.mxu0 0.0
    %137 = vmatpush1.msra.mxu0 0.0
    %138 = vmatprep.subr.mxu0 0.0
    %139 = vmatpush1.msra.mxu0 0.0
    %140 = vmatprep.subr.mxu0 0.0
    %141 = vmatpush1.msra.mxu0 0.0
    %142 = vmatprep.subr.mxu0 0.0
    %143 = vmatpush1.msra.mxu0 0.0
    %144 = vmatprep.subr.mxu0 0.0
    %145 = vmatpush1.msra.mxu0 0.0
    %146 = vmatprep.subr.mxu0 0.0
    %147 = vmatpush1.msra.mxu0 0.0
    %148 = vmatprep.subr.mxu0 0.0
    %149 = vmatpush1.msra.mxu0 0.0
    %150 = vmatprep.subr.mxu0 0.0
    %151 = vmatpush1.msra.mxu0 0.0
    %152 = vmatprep.subr.mxu0 0.0
    %153 = vmatpush1.msra.mxu0 0.0
    %154 = vmatprep.subr.mxu0 0.0
    %155 = vmatpush1.msra.mxu0 0.0
    %156 = vmatprep.subr.mxu0 0.0
    %157 = vmatpush1.msra.mxu0 0.0
    %158 = vmatprep.subr.mxu0 0.0
    %159 = vmatpush1.msra.mxu0 0.0
    %160 = vmatprep.subr.mxu0 0.0
    %161 = vmatpush1.msra.mxu0 0.0
    %162 = vmatprep.subr.mxu0 0.0
    %163 = vmatpush1.msra.mxu0 0.0
    %164 = vmatprep.subr.mxu0 0.0
    %165 = vmatpush1.msra.mxu0 0.0
    %166 = vmatprep.subr.mxu0 0.0
    %167 = vmatpush1.msra.mxu0 0.0
    %168 = vmatprep.subr.mxu0 0.0
    %169 = vmatpush1.msra.mxu0 0.0
    %170 = vmatprep.subr.mxu0 0.0
    %171 = vmatpush1.msra.mxu0 0.0
    %172 = vmatprep.subr.mxu0 0.0
    %173 = vmatpush1.msra.mxu0 0.0
    %174 = vmatprep.subr.mxu0 0.0
    %175 = vmatpush1.msra.mxu0 0.0
    %176 = vmatprep.subr.mxu0 0.0
    %177 = vmatpush1.msra.mxu0 0.0
    %178 = vmatprep.subr.mxu0 0.0
    %179 = vmatpush1.msra.mxu0 0.0
    %180 = vmatprep.subr.mxu0 0.0
    %181 = vmatpush1.msra.mxu0 0.0
    %182 = vmatprep.mubr.f32.mxu0 0.0
    %183 = vmatmul.mubr.f32.gmra.mrb[0].mxu0 %v116
    %v184 = vpop.f32.mrb[0].mxu0
    %v185 = vadd.f32 %v35, %v184
    %v186 = vpop.f32.mrb[0].mxu0
    %187 = vdwg.mxu0
    %s188 = scalar_lea.vmem [#allocation5], 4
    %189 = vst [vmem:[%s188] sm:$0xf] %v185
    // Predicated region
    $region18: #{tpu_custom_call.1} parent=1 // pred_check
      _
    $region19: #{tpu_custom_call.1} parent=1 // pred_check_branch
      %191 = sbr.rel (0) target = $region21
    $region20: #{tpu_custom_call.1} parent=1 // pred_region
      %s193 = ssub.s32 128, 128
      %194 = vsyncadd [#allocation4], %s193
      %s195 = sshll.u32 [#allocation5], 4
      %s196 = int_to_ptr.vmem [resolvable:$true] %s195
      %201 = dma.vmem_to_hbm [thread:$0]  %s196, 128, %s3, [#allocation4], 64, 64, 4
    $region21: #{tpu_custom_call.1} parent=1 // pred_fallthru
      _
    // Predicated region
    $region22: #{tpu_custom_call.1} parent=1 // pred_check
      _
    $region23: #{tpu_custom_call.1} parent=1 // pred_check_branch
      %203 = sbr.rel (0) target = $region25
    $region24: #{tpu_custom_call.1} parent=1 // pred_region
      %204 = dma.done [#allocation4], 128
    $region25: #{tpu_custom_call.1} parent=1 // pred_fallthru
      _
    %205 = vsyncpa [#allocation3], 1
    %206 = vsyncpa [#allocation4], 1

</llo_original>
